<compile_context>
chip_gen: v7x
topology: tpu7x:2x2x1
jax: 0.10.0
libtpu: 0.0.40
codegen_flags: <defaults>
</compile_context>

<pallas_src>
import functools

import jax
import jax.numpy as jnp
from jax.experimental import pallas as pl
from jax.experimental.pallas import tpu as pltpu


MiB = 1024 * 1024


# ---------------------------------------------------------------------------
# helpers
# ---------------------------------------------------------------------------
def _pick_tile_sublane(n, target):
    """Largest divisor of n <= target that is a multiple of 8, else n.
    (Falls back to the full extent for awkward n; consider padding for huge,
    prime-ish extents.)"""
    if n <= target:
        return n
    for t in range(target, 0, -1):
        if n % t == 0 and t % 8 == 0:
            return t
    return n


def _pick_tile_lane(n, target):
    """Largest divisor of n <= target that is a multiple of 128, else n."""
    if n <= target:
        return n
    for t in range(target, 0, -1):
        if n % t == 0 and t % 128 == 0:
            return t
    return n


def _mosaic_params(semantics, block_bytes):
    """Explicit scoped-VMEM request: double-buffered blocks + slack, floored
    at the common 32 MiB default (safe on v5e/v6e/v7x)."""
    limit = max(32 * MiB, int(2 * block_bytes) + MiB)
    return pltpu.CompilerParams(dimension_semantics=semantics,
                                vmem_limit_bytes=limit)


# ---------------------------------------------------------------------------
# Kernel 1: dense linear tile  out = x @ W + b   (shared by plain & fused QKV)
# ---------------------------------------------------------------------------
def _linear_kernel(x_ref, w_ref, b_ref, o_ref):
    y = jnp.dot(x_ref[...], w_ref[...], preferred_element_type=jnp.float32)
    o_ref[...] = (y + b_ref[...]).astype(o_ref.dtype)


def pallas_linear(x, w, b, *, tile_m_target=512, tile_n_target=512):
    """x: [M, Din] (compute dtype), w: [Din, Dout] (compute dtype), b: [Dout] f32
    -> [M, Dout] in x.dtype."""
    M, Din = x.shape
    Dout = w.shape[1]
    tm = _pick_tile_sublane(M, tile_m_target)
    tn = _pick_tile_lane(Dout, tile_n_target)
    bsz = x.dtype.itemsize
    block_bytes = (tm * Din + Din * tn + tm * tn) * bsz + tn * 4
    cost = pl.CostEstimate(
        flops=2 * M * Din * Dout, transcendentals=0,
        bytes_accessed=(M * Din + Din * Dout + M * Dout) * bsz + Dout * 4)
    return pl.pallas_call(
        _linear_kernel,
        out_shape=jax.ShapeDtypeStruct((M, Dout), x.dtype),
        grid=(M // tm, Dout // tn),
        in_specs=[
            pl.BlockSpec((tm, Din), lambda i, j: (i, 0)),
            pl.BlockSpec((Din, tn), lambda i, j: (0, j)),
            pl.BlockSpec((1, tn), lambda i, j: (0, j)),
        ],
        out_specs=pl.BlockSpec((tm, tn), lambda i, j: (i, j)),
        compiler_params=_mosaic_params(("parallel", "parallel"), block_bytes),
        cost_estimate=cost,
    )(x, w, b.reshape(1, Dout))


# ---------------------------------------------------------------------------
# Kernel 2: fused QKV projection (self-attention fast path)
#   grid (row-tile, projection); x DMA'd once per row tile, weight block is
#   one projection's (Din, d_model); packed output (3, M, d_model).
# ---------------------------------------------------------------------------
def pallas_fused_qkv(x, w_stack, b_stack, *, tile_m_target=512):
    """x: [M, Din] (compute dtype), w_stack: [3, Din, d_model] (compute dtype),
    b_stack: [3, 1, d_model] f32 -> qkv packed [3, M, d_model] in x.dtype."""
    M, Din = x.shape
    d_model = w_stack.shape[2]
    tm = _pick_tile_sublane(M, tile_m_target)
    bsz = x.dtype.itemsize
    block_bytes = (tm * Din + Din * d_model + tm * d_model) * bsz + d_model * 4
    cost = pl.CostEstimate(
        flops=2 * 3 * M * Din * d_model, transcendentals=0,
        bytes_accessed=(M * Din + 3 * Din * d_model + 3 * M * d_model) * bsz
                       + 3 * d_model * 4)
    return pl.pallas_call(
        _linear_kernel,
        out_shape=jax.ShapeDtypeStruct((3, M, d_model), x.dtype),
        grid=(M // tm, 3),
        in_specs=[
            # x index map constant over j (fast axis) -> fetched once per tile
            pl.BlockSpec((tm, Din), lambda i, j: (i, 0)),
            pl.BlockSpec((None, Din, d_model), lambda i, j: (j, 0, 0)),
            pl.BlockSpec((None, 1, d_model), lambda i, j: (j, 0, 0)),
        ],
        out_specs=pl.BlockSpec((None, tm, d_model), lambda i, j: (j, i, 0)),
        compiler_params=_mosaic_params(("parallel", "arbitrary"), block_bytes),
        cost_estimate=cost,
    )(x, w_stack, b_stack)


# ---------------------------------------------------------------------------
# Kernel 3: scaled dot-product attention, blocked over (batch, query-block).
#   Heads handled in-kernel via static lane slices; K/V blocks revisited across
#   query blocks so they are DMA'd once per batch.
# ---------------------------------------------------------------------------
def _sdpa_kernel(q_ref, k_ref, v_ref, mask_ref, ctx_ref, *maybe_attw,
                 n_heads, d_k, compute_dtype, approx_recip):
    attw_ref = maybe_attw[0] if maybe_attw else None
    scale = float(d_k) ** -0.5

    # Additive mask bias: computed ONCE per (batch, query-block), reused by
    # every head (single set of vregs instead of a per-head select).
    bias = jnp.where(mask_ref[...] != 0, jnp.float32(-1e9), jnp.float32(0.0))

    # TODO(synk): replace the static head unroll with a head grid axis (or a
    #             batched-head dot_general) and flash-style K/V streaming for
    #             very long S.
    for h in range(n_heads):                              # static unroll
        lo, hi = h * d_k, (h + 1) * d_k
        qh = q_ref[:, lo:hi]                              # (TILE_Q, d_k)
        kh = k_ref[:, lo:hi]                              # (S, d_k)
        vh = v_ref[:, lo:hi]                              # (S, d_k)

        # fold 1/sqrt(d_k) into q (O(TILE_Q*d_k) instead of O(TILE_Q*S))
        q_s = (qh.astype(jnp.float32) * scale).astype(compute_dtype)

        # q @ k^T without materializing a transpose: contract the last dims
        scores = jax.lax.dot_general(
            q_s, kh.astype(compute_dtype),
            dimension_numbers=(((1,), (1,)), ((), ())),
            preferred_element_type=jnp.float32) + bias    # (TILE_Q, S) f32

        # numerically-stable softmax, f32
        scores = scores - jnp.max(scores, axis=-1, keepdims=True)
        e = jnp.exp(scores)
        w = e * pl.reciprocal(jnp.sum(e, axis=-1, keepdims=True),
                              approx=approx_recip)

        ctx = jnp.dot(w.astype(compute_dtype), vh.astype(compute_dtype),
                      preferred_element_type=jnp.float32)  # (TILE_Q, d_k)

        # write each head's result immediately (no ctx_parts / concatenate)
        ctx_ref[:, lo:hi] = ctx.astype(ctx_ref.dtype)
        if attw_ref is not None:
            attw_ref[h] = w.astype(attw_ref.dtype)


def pallas_sdpa(q, k, v, mask_i8, n_heads, *, compute_dtype=jnp.float32,
                return_attn_weights=True, tile_q_target=256):
    """q/k/v: three [B, S, d_model] arrays, OR (packed self-attention path)
    the SAME [3, B, S, d_model] array passed three times.
    mask_i8: [B, S, S] int8 (nonzero = masked)."""
    packed = (q.ndim == 4)
    if packed:
        _, B, S, d_model = q.shape
    else:
        B, S, d_model = q.shape
    d_k = d_model // n_heads
    tq = _pick_tile_sublane(S, tile_q_target)
    n_q = S // tq

    if packed:
        q_spec = pl.BlockSpec((None, None, tq, d_model),
                              lambda b, qi: (0, b, qi, 0))
        k_spec = pl.BlockSpec((None, None, S, d_model),
                              lambda b, qi: (1, b, 0, 0))
        v_spec = pl.BlockSpec((None, None, S, d_model),
                              lambda b, qi: (2, b, 0, 0))
    else:
        q_spec = pl.BlockSpec((None, tq, d_model), lambda b, qi: (b, qi, 0))
        k_spec = pl.BlockSpec((None, S, d_model), lambda b, qi: (b, 0, 0))
        v_spec = pl.BlockSpec((None, S, d_model), lambda b, qi: (b, 0, 0))
    mask_spec = pl.BlockSpec((None, tq, S), lambda b, qi: (b, qi, 0))

    ctx_shape = jax.ShapeDtypeStruct((B, S, d_model), q.dtype)
    ctx_spec = pl.BlockSpec((None, tq, d_model), lambda b, qi: (b, qi, 0))
    if return_attn_weights:
        out_shape = (ctx_shape,
                     jax.ShapeDtypeStruct((B, n_heads, S, S), jnp.float32))
        out_specs = (ctx_spec,
                     pl.BlockSpec((None, n_heads, tq, S),
                                  lambda b, qi: (b, 0, qi, 0)))
    else:
        out_shape = ctx_shape
        out_specs = ctx_spec

    bsz = q.dtype.itemsize
    block_bytes = (2 * tq * d_model + 2 * S * d_model) * bsz + tq * S
    if return_attn_weights:
        block_bytes += n_heads * tq * S * 4
    cost = pl.CostEstimate(
        flops=4 * B * S * S * d_model,
        transcendentals=B * n_heads * S * S,
        bytes_accessed=(4 * B * S * d_model) * bsz + B * S * S
                       + (4 * B * n_heads * S * S if return_attn_weights else 0))

    kernel = functools.partial(
        _sdpa_kernel, n_heads=n_heads, d_k=d_k, compute_dtype=compute_dtype,
        approx_recip=(jnp.dtype(compute_dtype) != jnp.dtype(jnp.float32)))

    return pl.pallas_call(
        kernel,
        out_shape=out_shape,
        grid=(B, n_q),
        in_specs=[q_spec, k_spec, v_spec, mask_spec],
        out_specs=out_specs,
        # both axes parallel -> v7x shards batch AND query blocks over 2 TCs
        compiler_params=_mosaic_params(("parallel", "parallel"), block_bytes),
        cost_estimate=cost,
    )(q, k, v, mask_i8)


# ---------------------------------------------------------------------------
# Parameter preparation (one-off): pre-cast to compute dtype, pre-stack QKV
# ---------------------------------------------------------------------------
def prepare_params(params, compute_dtype=jnp.float32):
    cd = compute_dtype
    wq, wk, wv = params["wq_w"], params["wk_w"], params["wv_w"]
    return dict(
        wqkv_w=jnp.stack([wq, wk, wv], axis=0).astype(cd),        # (3, d, d)
        wqkv_b=jnp.stack([params["wq_b"], params["wk_b"], params["wv_b"]],
                         axis=0)[:, None, :].astype(jnp.float32),  # (3, 1, d)
        wq_w=wq.astype(cd), wk_w=wk.astype(cd), wv_w=wv.astype(cd),
        wq_b=params["wq_b"].astype(jnp.float32),
        wk_b=params["wk_b"].astype(jnp.float32),
        wv_b=params["wv_b"].astype(jnp.float32),
        out_w=params["out_w"].astype(cd),
        out_b=params["out_b"].astype(jnp.float32),
    )


# ---------------------------------------------------------------------------
# MultiHeadAttention forward
# ---------------------------------------------------------------------------
def multi_head_attention(prepared, Q, K, V, attn_mask, n_heads,
                         compute_dtype=jnp.float32, return_attn_weights=True):
    B, S, d_model = Q.shape
    mask_i8 = attn_mask.astype(jnp.int8)                  # nonzero == masked
    cd = compute_dtype

    if Q is K and K is V:
        # Self-attention fast path (object-identity check): x read from HBM
        # once, three projections from a pre-stacked weight, packed output
        # consumed by SDPA with no wrapper slices.
        x = Q.reshape(B * S, d_model).astype(cd)
        qkv = pallas_fused_qkv(x, prepared["wqkv_w"], prepared["wqkv_b"])
        qkv = qkv.reshape(3, B, S, d_model)                # free view
        sdpa_out = pallas_sdpa(qkv, qkv, qkv, mask_i8, n_heads,
                               compute_dtype=cd,
                               return_attn_weights=return_attn_weights)
    else:
        q2 = pallas_linear(Q.reshape(B * S, d_model).astype(cd),
                           prepared["wq_w"], prepared["wq_b"])
        k2 = pallas_linear(K.reshape(B * S, d_model).astype(cd),
                           prepared["wk_w"], prepared["wk_b"])
        v2 = pallas_linear(V.reshape(B * S, d_model).astype(cd),
                           prepared["wv_w"], prepared["wv_b"])
        sdpa_out = pallas_sdpa(q2.reshape(B, S, d_model),
                               k2.reshape(B, S, d_model),
                               v2.reshape(B, S, d_model),
                               mask_i8, n_heads, compute_dtype=cd,
                               return_attn_weights=return_attn_weights)

    if return_attn_weights:
        ctx, attn_weights = sdpa_out
    else:
        ctx, attn_weights = sdpa_out, None

    # TODO(synk): optionally fuse this output projection into the SDPA
    #             epilogue (saves an HBM round trip of the context).
    out = pallas_linear(ctx.reshape(B * S, d_model),
                        prepared["out_w"], prepared["out_b"])
    return out.reshape(B, S, d_model), attn_weights


# ---------------------------------------------------------------------------
# Deterministic parameter init (PyTorch nn.Linear-style uniform bounds)
# ---------------------------------------------------------------------------
def init_params(key, d_model):
    def linear_init(k, fan_in, fan_out):
        kw, kb = jax.random.split(k)
        bound = 1.0 / jnp.sqrt(jnp.float32(fan_in))
        w = jax.random.uniform(kw, (fan_in, fan_out), jnp.float32, -bound, bound)
        b = jax.random.uniform(kb, (fan_out,), jnp.float32, -bound, bound)
        return w, b

    k1, k2, k3, k4 = jax.random.split(key, 4)
    wq_w, wq_b = linear_init(k1, d_model, d_model)
    wk_w, wk_b = linear_init(k2, d_model, d_model)
    wv_w, wv_b = linear_init(k3, d_model, d_model)
    out_w, out_b = linear_init(k4, d_model, d_model)
    return dict(wq_w=wq_w, wq_b=wq_b, wk_w=wk_w, wk_b=wk_b,
                wv_w=wv_w, wv_b=wv_b, out_w=out_w, out_b=out_b)


# ---------------------------------------------------------------------------
# Pure-JAX reference (mirrors the PyTorch forward) for correctness checks
# ---------------------------------------------------------------------------
def reference_mha(params, Q, K, V, attn_mask, n_heads):
    B, S, d_model = Q.shape
    d_k = d_model // n_heads

    def proj(x, w, b):
        return (x.reshape(B * S, d_model) @ w + b).reshape(
            B, S, n_heads, d_k).transpose(0, 2, 1, 3)

    q = proj(Q, params["wq_w"], params["wq_b"])
    k = proj(K, params["wk_w"], params["wk_b"])
    v = proj(V, params["wv_w"], params["wv_b"])
    scores = jnp.einsum("bhqd,bhkd->bhqk", q, k) / jnp.sqrt(jnp.float32(d_k))
    scores = jnp.where(attn_mask[:, None, :, :], -1e9, scores)
    weights = jax.nn.softmax(scores, axis=-1)
    attn = jnp.einsum("bhqk,bhkd->bhqd", weights, v)
    attn = attn.transpose(0, 2, 1, 3).reshape(B * S, n_heads * d_k)
    out = (attn @ params["out_w"] + params["out_b"]).reshape(B, S, d_model)
    return out, weights


if __name__ == "__main__":
    B, S, d_model, n_heads = 2, 8, 32, 4

    key = jax.random.PRNGKey(0)
    kp, kx, kq, kk, kv = jax.random.split(key, 5)

    params = init_params(kp, d_model)
    X = jax.random.normal(kx, (B, S, d_model), jnp.float32)
    Q = jax.random.normal(kq, (B, S, d_model), jnp.float32)
    K = jax.random.normal(kk, (B, S, d_model), jnp.float32)
    V = jax.random.normal(kv, (B, S, d_model), jnp.float32)
    # causal mask: True (masked) where key position > query position
    attn_mask = jnp.triu(jnp.ones((S, S), jnp.bool_), k=1)[None].repeat(B, axis=0)

    ref_out, ref_w = reference_mha(params, X, X, X, attn_mask, n_heads)

    # 1) self-attention (packed fused-QKV path), f32 compute, attn_weights on
    prep32 = prepare_params(params, jnp.float32)
    out, attw = multi_head_attention(prep32, X, X, X, attn_mask, n_heads,
                                     compute_dtype=jnp.float32,
                                     return_attn_weights=True)
    out = jax.block_until_ready(out)
    attw = jax.block_until_ready(attw)
    assert out.shape == (B, S, d_model)
    assert attw.shape == (B, n_heads, S, S)
    assert jnp.allclose(out, ref_out, atol=1e-4, rtol=1e-4)
    assert jnp.allclose(attw, ref_w, atol=1e-4, rtol=1e-4)

    # 2) cross-attention (distinct Q/K/V -> separate tiled linears), f32 compute
    out2, attw2 = multi_head_attention(prep32, Q, K, V, attn_mask, n_heads,
                                       compute_dtype=jnp.float32,
                                       return_attn_weights=True)
    out2 = jax.block_until_ready(out2)
    ref_out2, ref_w2 = reference_mha(params, Q, K, V, attn_mask, n_heads)
    assert jnp.allclose(out2, ref_out2, atol=1e-4, rtol=1e-4)
    assert jnp.allclose(attw2, ref_w2, atol=1e-4, rtol=1e-4)

    # 3) perf path: bf16 storage + bf16 MXU inputs (f32 accumulation),
    #    attn_weights writeback skipped entirely
    prep16 = prepare_params(params, jnp.bfloat16)
    out3, attw3 = multi_head_attention(prep16, X, X, X, attn_mask, n_heads,
                                       compute_dtype=jnp.bfloat16,
                                       return_attn_weights=False)
    out3 = jax.block_until_ready(out3)
    assert attw3 is None
    assert out3.shape == (B, S, d_model)
    assert jnp.allclose(out3.astype(jnp.float32), ref_out, atol=1e-1, rtol=1e-1)

    print("KERNEL_OK")
</pallas_src>

<mosaic_0001>
module attributes {stable_mosaic.version = 11 : i64} {
  func.func @_linear_kernel(%arg0: i32, %arg1: i32, %arg2: memref<16x32xf32, #tpu.memory_space<vmem>>, %arg3: memref<1x32x32xf32, #tpu.memory_space<vmem>>, %arg4: memref<1x1x32xf32, #tpu.memory_space<vmem>>, %arg5: memref<1x16x32xf32, #tpu.memory_space<vmem>>) attributes {dimension_semantics = [#tpu.dimension_semantics<parallel>, #tpu.dimension_semantics<arbitrary>], iteration_bounds = array<i64: 1, 3>, scalar_prefetch = 0 : i64, scratch_operands = 0 : i64, tpu.core_type = #tpu.core_type<tc>, window_params = [{transform_indices = @transform_0, window_bounds = array<i64: 16, 32>}, {transform_indices = @transform_1, window_bounds = array<i64: 1, 32, 32>}, {transform_indices = @transform_2, window_bounds = array<i64: 1, 1, 32>}, {transform_indices = @transform_3, window_bounds = array<i64: 1, 16, 32>}]} {
    %c0 = arith.constant 0 : index
    %c0_0 = arith.constant 0 : index
    %0 = vector.load %arg2[%c0, %c0_0] : memref<16x32xf32, #tpu.memory_space<vmem>>, vector<16x32xf32>
    %c0_1 = arith.constant 0 : index
    %c0_2 = arith.constant 0 : index
    %c0_3 = arith.constant 0 : index
    %1 = vector.load %arg3[%c0_1, %c0_2, %c0_3] : memref<1x32x32xf32, #tpu.memory_space<vmem>>, vector<1x32x32xf32>
    %2 = vector.shape_cast %1 : vector<1x32x32xf32> to vector<32x32xf32>
    %cst = arith.constant dense<0.000000e+00> : vector<16x32xf32>
    %3 = tpu.matmul %0, %2, %cst {dimension_numbers = #tpu.dot_dimension_numbers<[1], [0], [0], [1], [0, 0, 1, 1], [], []>} : vector<16x32xf32>, vector<32x32xf32>, vector<16x32xf32> -> vector<16x32xf32>
    %c0_4 = arith.constant 0 : index
    %c0_5 = arith.constant 0 : index
    %c0_6 = arith.constant 0 : index
    %4 = vector.load %arg4[%c0_4, %c0_5, %c0_6] : memref<1x1x32xf32, #tpu.memory_space<vmem>>, vector<1x1x32xf32>
    %5 = vector.shape_cast %4 : vector<1x1x32xf32> to vector<1x32xf32>
    %6 = vector.broadcast %5 : vector<1x32xf32> to vector<16x32xf32>
    %7 = arith.addf %3, %6 : vector<16x32xf32>
    %c0_7 = arith.constant 0 : index
    %c0_8 = arith.constant 0 : index
    %c0_9 = arith.constant 0 : index
    %8 = vector.load %arg5[%c0_7, %c0_8, %c0_9] : memref<1x16x32xf32, #tpu.memory_space<vmem>>, vector<1x16x32xf32>
    %9 = vector.shape_cast %8 : vector<1x16x32xf32> to vector<16x32xf32>
    %10 = vector.shape_cast %7 : vector<16x32xf32> to vector<1x16x32xf32>
    tpu.vector_store %arg5[%c0_7, %c0_8, %c0_9], %10 {strides = array<i32>} : memref<1x16x32xf32, #tpu.memory_space<vmem>>, vector<1x16x32xf32>,
    return
  }
  func.func @transform_0(%arg0: i32, %arg1: i32) -> (i32, i32) {
    %c0_i32 = arith.constant 0 : i32
    %c0_i32_0 = arith.constant 0 : i32
    return %arg0, %c0_i32 : i32, i32
  }
  func.func @transform_1(%arg0: i32, %arg1: i32) -> (i32, i32, i32) {
    %c0_i32 = arith.constant 0 : i32
    %c0_i32_0 = arith.constant 0 : i32
    %c0_i32_1 = arith.constant 0 : i32
    return %arg1, %c0_i32, %c0_i32_0 : i32, i32, i32
  }
  func.func @transform_2(%arg0: i32, %arg1: i32) -> (i32, i32, i32) {
    %c0_i32 = arith.constant 0 : i32
    %c0_i32_0 = arith.constant 0 : i32
    %c0_i32_1 = arith.constant 0 : i32
    return %arg1, %c0_i32, %c0_i32_0 : i32, i32, i32
  }
  func.func @transform_3(%arg0: i32, %arg1: i32) -> (i32, i32, i32) {
    %c0_i32 = arith.constant 0 : i32
    %c0_i32_0 = arith.constant 0 : i32
    return %arg1, %arg0, %c0_i32 : i32, i32, i32
  }
}

</mosaic_0001>

<llo_original>
// kernel: tpu_custom_call.1
$region0: #{tpu_custom_call.1}
  #allocation0 [shape = 'u32[]', space=smem, size = 0x4, offset = 0x4, fixed_abs, tag = 'smem constant byte address 0x4 - core index']
  #allocation1 [shape = 'u32[144,128]{1,0:T(1,128)}', space=vmem, size = 0x12000, scoped, tag = 'internal scratch']
  %s0 = inlined_call_operand.hbm [shape: f32[16,32], index: 0, kind: input, shape index: {}]
  %s1 = inlined_call_operand.hbm [shape: f32[3,32,32], index: 1, kind: input, shape index: {}]
  %s2 = inlined_call_operand.vmem [shape: f32[3,1,32], index: 2, kind: input, shape index: {}]
  %s3 = inlined_call_operand.hbm [shape: f32[3,16,32], index: 3, kind: output, shape index: {}]
  %s4 = sld [smem:[#allocation0]]
  $region53: #{tpu_custom_call.1} parent=0
    _
  %s6 = ssub.s32 1, %s4
  %s7 = scalar_select 0, %s6, %s4
  $region1: #{tpu_custom_call.1} parent=0
    #allocation2 [shape = 'u8[8192]{0}', space=vmem, size = 0x2000, scoped, tag = 'input window, operand 0, single buffered']
    #allocation3 [shape = 's32[2]{0}', space=sflag, size = 0x8, scoped, tag = 'scoped memory for tpu_custom_call.1']
    #allocation4 [shape = 's32[2]{0}', space=sflag, size = 0x8, scoped, tag = 'scoped memory for tpu_custom_call.1']
    #allocation5 [shape = 'u8[32768]{0}', space=vmem, size = 0x8000, scoped, tag = 'input window, operand 1']
    #allocation6 [shape = 's32[2]{0}', space=sflag, size = 0x8, scoped, tag = 'scoped memory for tpu_custom_call.1']
    #allocation7 [shape = 'u8[16384]{0}', space=vmem, size = 0x4000, scoped, tag = 'output window, operand 0']
    %8 = vsyncpa [#allocation3], 0
    %9 = vsyncpa [#allocation6], 0
    %s10 = scalar_lea.sflag [#allocation6], 1
    %11 = vsyncpa %s10, 0
    %12 = vsyncpa [#allocation4], 0
    %s13 = scalar_lea.sflag [#allocation4], 1
    %14 = vsyncpa %s13, 0
    loop: start=0, step=1, limit=5
    $region2: #{tpu_custom_call.1} parent=1 // loop_pre_header
      _
    $region3: #{tpu_custom_call.1} parent=1 // loop_header
      %s16 = sphi 0, %s20
      %p17 = scmp.ge.s32.totalorder %s16, 5
      %s23 = sphi 0, %s35
      %s24 = sphi 0, %s31
      %s25 = sphi 0, %s23
      %s26 = sphi 0, %s24
      %s27 = sphi 0, %s25
      %s28 = sphi 0, %s26
      %s38 = sphi 0, %s40
      %s41 = sphi 0, %s38
      %s42 = sphi 0, %s41
      %s58 = sphi 0, %s42
      %s64 = sphi 0, %s66
      %s67 = sphi 0, %s64
      %s68 = sphi 0, %s67
      %s84 = sphi 0, %s68
      %s90 = sphi 0, %s92
      %s93 = sphi 0, %s90
      %s94 = sphi 0, %s93
      %s110 = sphi 0, %s94
      %s118 = sphi 0, %s120
      %s121 = sphi 0, %s118
      %s122 = sphi 0, %s121
      %s138 = sphi 0, %s122
    $region4: #{tpu_custom_call.1} parent=1 // loop_header_branch
      %19 = sbr.rel (%p17) target = $region8
    $region5: #{tpu_custom_call.1} parent=1 // loop_body
      %s21 = ssub.s32 %s16, 1
      %s22 = ssub.s32 %s16, 2
      %s29 = sadd.s32 1, %s24
      %p30 = scmp.ge.s32.totalorder %s29, 3
      %s31 = scalar_select %p30, 0, %s29
      %s32 = sadd.s32 1, %s23
      %s33 = scalar_select %p30, %s32, %s23
      %p34 = scmp.ge.s32.totalorder %s33, 1
      %s35 = scalar_select %p34, 0, %s33
      %s36 = ssub.s32 %s23, %s35
      %p37 = scmp.eq.s32.totalorder %s36, 0
      %s39 = sadd.s32 %s38, 1
      %s40 = scalar_select %p37, %s38, %s39
      %p43 = pneg %p37
      %p44 = scmp.eq.s32.totalorder %s16, 2
      %p45 = por %p43, %p44
      %p46 = scmp.ne.s32.totalorder %s38, %s41
      %p47 = scmp.eq.s32.totalorder %s16, 0
      %p48 = por %p46, %p47
      %p49 = scmp.ne.s32.totalorder %s38, %s41
      %p50 = scmp.eq.s32.totalorder %s21, 2
      %p51 = por %p49, %p50
      %p52 = scmp.ne.s32.totalorder %s41, %s42
      %p53 = scmp.eq.s32.totalorder %s21, 0
      %p54 = por %p52, %p53
      %p55 = scmp.ne.s32.totalorder %s41, %s42
      %p56 = scmp.eq.s32.totalorder %s22, 2
      %p57 = por %p55, %p56
      %p59 = scmp.ne.s32.totalorder %s42, %s58
      %p60 = scmp.eq.s32.totalorder %s22, 0
      %p61 = por %p59, %p60
      %s62 = ssub.s32 %s24, %s31
      %p63 = scmp.eq.s32.totalorder %s62, 0
      %s65 = sadd.s32 %s64, 1
      %s66 = scalar_select %p63, %s64, %s65
      %p69 = pneg %p63
      %p70 = scmp.eq.s32.totalorder %s16, 2
      %p71 = por %p69, %p70
      %p72 = scmp.ne.s32.totalorder %s64, %s67
      %p73 = scmp.eq.s32.totalorder %s16, 0
      %p74 = por %p72, %p73
      %p75 = scmp.ne.s32.totalorder %s64, %s67
      %p76 = scmp.eq.s32.totalorder %s21, 2
      %p77 = por %p75, %p76
      %p78 = scmp.ne.s32.totalorder %s67, %s68
      %p79 = scmp.eq.s32.totalorder %s21, 0
      %p80 = por %p78, %p79
      %p81 = scmp.ne.s32.totalorder %s67, %s68
      %p82 = scmp.eq.s32.totalorder %s22, 2
      %p83 = por %p81, %p82
      %p85 = scmp.ne.s32.totalorder %s68, %s84
      %p86 = scmp.eq.s32.totalorder %s22, 0
      %p87 = por %p85, %p86
      %s88 = ssub.s32 %s24, %s31
      %p89 = scmp.eq.s32.totalorder %s88, 0
      %s91 = sadd.s32 %s90, 1
      %s92 = scalar_select %p89, %s90, %s91
      %p95 = pneg %p89
      %p96 = scmp.eq.s32.totalorder %s16, 2
      %p97 = por %p95, %p96
      %p98 = scmp.ne.s32.totalorder %s90, %s93
      %p99 = scmp.eq.s32.totalorder %s16, 0
      %p100 = por %p98, %p99
      %p101 = scmp.ne.s32.totalorder %s90, %s93
      %p102 = scmp.eq.s32.totalorder %s21, 2
      %p103 = por %p101, %p102
      %p104 = scmp.ne.s32.totalorder %s93, %s94
      %p105 = scmp.eq.s32.totalorder %s21, 0
      %p106 = por %p104, %p105
      %p107 = scmp.ne.s32.totalorder %s93, %s94
      %p108 = scmp.eq.s32.totalorder %s22, 2
      %p109 = por %p107, %p108
      %p111 = scmp.ne.s32.totalorder %s94, %s110
      %p112 = scmp.eq.s32.totalorder %s22, 0
      %p113 = por %p111, %p112
      %s114 = ssub.s32 %s24, %s31
      %s115 = ssub.s32 %s23, %s35
      %s116 = sor.u32 %s114, %s115
      %p117 = scmp.eq.s32.totalorder %s116, 0
      %s119 = sadd.s32 %s118, 1
      %s120 = scalar_select %p117, %s118, %s119
      %p123 = pneg %p117
      %p124 = scmp.eq.s32.totalorder %s16, 2
      %p125 = por %p123, %p124
      %p126 = scmp.ne.s32.totalorder %s118, %s121
      %p127 = scmp.eq.s32.totalorder %s16, 0
      %p128 = por %p126, %p127
      %p129 = scmp.ne.s32.totalorder %s118, %s121
      %p130 = scmp.eq.s32.totalorder %s21, 2
      %p131 = por %p129, %p130
      %p132 = scmp.ne.s32.totalorder %s121, %s122
      %p133 = scmp.eq.s32.totalorder %s21, 0
      %p134 = por %p132, %p133
      %p135 = scmp.ne.s32.totalorder %s121, %s122
      %p136 = scmp.eq.s32.totalorder %s22, 2
      %p137 = por %p135, %p136
      %p139 = scmp.ne.s32.totalorder %s122, %s138
      %p140 = scmp.eq.s32.totalorder %s22, 0
      %p141 = por %p139, %p140
      %p142 = scmp.le.s32.totalorder 1, %s16
      %p143 = scmp.lt.s32.totalorder %s16, 4
      %p144 = pnand %p142, %p143
      %p145 = pneg %p144
      // Predicated region
      $region9: #{tpu_custom_call.1} parent=5 // pred_check
        _
      $region10: #{tpu_custom_call.1} parent=5 // pred_check_branch
        %147 = sbr.rel (%p144) target = $region12
      $region11: #{tpu_custom_call.1} parent=5 // pred_region
        %s148 = ssub.s32 %s16, 1
        // Predicated region
        $region13: #{tpu_custom_call.1} parent=11 // pred_check
          %p149 = pneg %p54
        $region14: #{tpu_custom_call.1} parent=11 // pred_check_branch
          %151 = sbr.rel (%p149) target = $region16
        $region15: #{tpu_custom_call.1} parent=11 // pred_region
          %s152 = smul.u32 2, %s25
          %s154 = ssub.s32 256, 256
          %155 = vsyncadd [#allocation3], %s154
          %s156 = smul.addr %s152, 128
          %s157 = scalar_lea.hbm %s0, %s156
          %s158 = sshll.u32 [#allocation2], 4
          %s159 = int_to_ptr.vmem [resolvable:$true] %s158
          %164 = dma.hbm_to_vmem [thread:$0]  %s157, 256, %s159, [#allocation3], 128, 128, 8
        $region16: #{tpu_custom_call.1} parent=11 // pred_fallthru
          _
      $region12: #{tpu_custom_call.1} parent=5 // pred_fallthru
        _
      %p165 = scmp.lt.s32.totalorder %s16, 3
      // Predicated region
      $region17: #{tpu_custom_call.1} parent=5 // pred_check
        %p166 = pneg %p165
      $region18: #{tpu_custom_call.1} parent=5 // pred_check_branch
        %168 = sbr.rel (%p166) target = $region20
      $region19: #{tpu_custom_call.1} parent=5 // pred_region
        // Predicated region
        $region21: #{tpu_custom_call.1} parent=19 // pred_check
          %p169 = pneg %p74
        $region22: #{tpu_custom_call.1} parent=19 // pred_check_branch
          %171 = sbr.rel (%p169) target = $region24
        $region23: #{tpu_custom_call.1} parent=19 // pred_region
          %s172 = sand.u32 %s64, 1
          %s173 = scalar_lea.sflag [#allocation6], %s172
          %s174 = sand.u32 %s64, 1
          %s175 = smul.addr %s174, 32
          %s176 = scalar_lea.vmem [#allocation5], %s175
          %s178 = ssub.s32 512, 512
          %179 = vsyncadd %s173, %s178
          %s180 = smul.addr %s24, 4
          %s181 = smul.addr %s180, 128
          %s182 = scalar_lea.hbm %s1, %s181
          %s183 = sshll.u32 %s176, 4
          %s184 = int_to_ptr.vmem [resolvable:$true] %s183
          %189 = dma.hbm_to_vmem [thread:$0]  %s182, 512, %s184, %s173, 128, 128, 8
        $region24: #{tpu_custom_call.1} parent=19 // pred_fallthru
          _
        // Predicated region
        $region25: #{tpu_custom_call.1} parent=19 // pred_check
          %p190 = pneg %p100
        $region26: #{tpu_custom_call.1} parent=19 // pred_check_branch
          %192 = sbr.rel (%p190) target = $region28
        $region27: #{tpu_custom_call.1} parent=19 // pred_region
          %p193 = scmp.lt.s32.totalorder %s24, 2
          %s194 = scalar_select %p193, %s24, 2
          %s195 = scalar_lea.vmem %s2, %s194
        $region28: #{tpu_custom_call.1} parent=19 // pred_fallthru
          _
      $region20: #{tpu_custom_call.1} parent=5 // pred_fallthru
        _
      %p196 = scmp.le.s32.totalorder 1, %s16
      %p197 = scmp.lt.s32.totalorder %s16, 4
      %p198 = pnand %p196, %p197
      %p199 = pneg %p198
      // Predicated region
      $region29: #{tpu_custom_call.1} parent=5 // pred_check
        _
      $region30: #{tpu_custom_call.1} parent=5 // pred_check_branch
        %201 = sbr.rel (%p198) target = $region32
      $region31: #{tpu_custom_call.1} parent=5 // pred_region
        %s202 = ssub.s32 %s16, 1
        // Predicated region
        $region33: #{tpu_custom_call.1} parent=31 // pred_check
          %p203 = pneg %p54
        $region34: #{tpu_custom_call.1} parent=31 // pred_check_branch
          %205 = sbr.rel (%p203) target = $region36
        $region35: #{tpu_custom_call.1} parent=31 // pred_region
          %206 = dma.done [#allocation3], 256
        $region36: #{tpu_custom_call.1} parent=31 // pred_fallthru
          _
        %s207 = sand.u32 %s67, 1
        %s208 = scalar_lea.sflag [#allocation6], %s207
        %s209 = sand.u32 %s67, 1
        %s210 = smul.addr %s209, 32
        %s211 = scalar_lea.vmem [#allocation5], %s210
        // Predicated region
        $region37: #{tpu_custom_call.1} parent=31 // pred_check
          %p212 = pneg %p80
        $region38: #{tpu_custom_call.1} parent=31 // pred_check_branch
          %214 = sbr.rel (%p212) target = $region40
        $region39: #{tpu_custom_call.1} parent=31 // pred_region
          %215 = dma.done %s208, 512
        $region40: #{tpu_custom_call.1} parent=31 // pred_fallthru
          _
        %p216 = pneg %p54
        %p217 = pneg %p51
        %s218 = sand.u32 %s67, 1
        %s219 = scalar_lea.sflag [#allocation6], %s218
        %s220 = sand.u32 %s67, 1
        %s221 = smul.addr %s220, 32
        %s222 = scalar_lea.vmem [#allocation5], %s221
        %p223 = pneg %p80
        %p224 = pneg %p77
        %p225 = scmp.lt.s32.totalorder %s26, 2
        %s226 = scalar_select %p225, %s26, 2
        %s227 = scalar_lea.vmem %s2, %s226
        %p228 = pneg %p106
        %p229 = pneg %p103
        %p230 = pneg %p134
        %p231 = pneg %p131
        %s232 = sand.u32 %s121, 1
        %s233 = scalar_lea.sflag [#allocation4], %s232
        %s234 = sand.u32 %s121, 1
        %s235 = smul.addr %s234, 16
        %s236 = scalar_lea.vmem [#allocation7], %s235
        %s237 = smul.u32 2, %s25
        %p238 = scmp.lt.s32.totalorder %s26, 2
        %s239 = scalar_select %p238, %s26, 2
        %s240 = scalar_lea.vmem %s2, %s239
        %s241 = smul.u32 2, %s25
        %v242 = vld [vmem:[#allocation2] sm:$0xff]
        %v243 = vld [vmem:[#allocation2 + $0x8] sm:$0xff]
        %v244 = vld [vmem:[%s211] sm:$0xff]
        %v245 = vld [vmem:[%s211 + $0x8] sm:$0xff]
        %v246 = vld [vmem:[%s211 + $0x10] sm:$0xff]
        %v247 = vld [vmem:[%s211 + $0x18] sm:$0xff]
        %v248 = vld [vmem:[%s240] sm:$0x1]
        %v250 = vlaneseq
        %v251 = vshrl.u32 %v250, 7
        %v252 = vsub.s32 0, %v251
        %v253 = vrot.slane %v248, %v252
        %vm255 = vcmask 261120
        %v257 = vsel %vm255, %v242, 0
        %v260 = vsel %vm255, %v243, 0
        %262 = vmatprep.subr.mxu0 0.0
        %263 = vmatpush1.msra.mxu0 %v244
        %264 = vmatprep.subr.mxu0 0.0
        %265 = vmatpush1.msra.mxu0 %v245
        %266 = vmatprep.subr.mxu0 0.0
        %267 = vmatpush1.msra.mxu0 %v246
        %268 = vmatprep.subr.mxu0 0.0
        %269 = vmatpush1.msra.mxu0 %v247
        %270 = vmatprep.subr.mxu0 0.0
        %271 = vmatpush1.msra.mxu0 0.0
        %272 = vmatprep.subr.mxu0 0.0
        %273 = vmatpush1.msra.mxu0 0.0
        %274 = vmatprep.subr.mxu0 0.0
        %275 = vmatpush1.msra.mxu0 0.0
        %276 = vmatprep.subr.mxu0 0.0
        %277 = vmatpush1.msra.mxu0 0.0
        %278 = vmatprep.subr.mxu0 0.0
        %279 = vmatpush1.msra.mxu0 0.0
        %280 = vmatprep.subr.mxu0 0.0
        %281 = vmatpush1.msra.mxu0 0.0
        %282 = vmatprep.subr.mxu0 0.0
        %283 = vmatpush1.msra.mxu0 0.0
        %284 = vmatprep.subr.mxu0 0.0
        %285 = vmatpush1.msra.mxu0 0.0
        %286 = vmatprep.subr.mxu0 0.0
        %287 = vmatpush1.msra.mxu0 0.0
        %288 = vmatprep.subr.mxu0 0.0
        %289 = vmatpush1.msra.mxu0 0.0
        %290 = vmatprep.subr.mxu0 0.0
        %291 = vmatpush1.msra.mxu0 0.0
        %292 = vmatprep.subr.mxu0 0.0
        %293 = vmatpush1.msra.mxu0 0.0
        %294 = vmatprep.subr.mxu0 0.0
        %295 = vmatpush1.msra.mxu0 0.0
        %296 = vmatprep.subr.mxu0 0.0
        %297 = vmatpush1.msra.mxu0 0.0
        %298 = vmatprep.subr.mxu0 0.0
        %299 = vmatpush1.msra.mxu0 0.0
        %300 = vmatprep.subr.mxu0 0.0
        %301 = vmatpush1.msra.mxu0 0.0
        %302 = vmatprep.subr.mxu0 0.0
        %303 = vmatpush1.msra.mxu0 0.0
        %304 = vmatprep.subr.mxu0 0.0
        %305 = vmatpush1.msra.mxu0 0.0
        %306 = vmatprep.subr.mxu0 0.0
        %307 = vmatpush1.msra.mxu0 0.0
        %308 = vmatprep.subr.mxu0 0.0
        %309 = vmatpush1.msra.mxu0 0.0
        %310 = vmatprep.subr.mxu0 0.0
        %311 = vmatpush1.msra.mxu0 0.0
        %312 = vmatprep.subr.mxu0 0.0
        %313 = vmatpush1.msra.mxu0 0.0
        %314 = vmatprep.subr.mxu0 0.0
        %315 = vmatpush1.msra.mxu0 0.0
        %316 = vmatprep.subr.mxu0 0.0
        %317 = vmatpush1.msra.mxu0 0.0
        %318 = vmatprep.subr.mxu0 0.0
        %319 = vmatpush1.msra.mxu0 0.0
        %320 = vmatprep.subr.mxu0 0.0
        %321 = vmatpush1.msra.mxu0 0.0
        %322 = vmatprep.subr.mxu0 0.0
        %323 = vmatpush1.msra.mxu0 0.0
        %324 = vmatprep.subr.mxu0 0.0
        %325 = vmatpush1.msra.mxu0 0.0
        %326 = vmatprep.mubr.f32.mxu0 0.0
        %327 = vmatmul.mubr.f32.gmra.mrb[0].mxu0 %v257
        %v328 = vpop.f32.mrb[0].mxu0
        %v329 = vadd.f32 %v253, %v328
        %v330 = vpop.f32.mrb[0].mxu0
        %331 = vmatprep.mubr.f32.mxu0 0.0
        %332 = vmatmul.mubr.f32.gmra.mrb[0].mxu0 %v260
        %v333 = vpop.f32.mrb[0].mxu0
        %v334 = vadd.f32 %v253, %v333
        %v335 = vpop.f32.mrb[0].mxu0
        %336 = vdwg.mxu0
        %337 = vst.msk [vmem:[%s236] sm:$0xff] %vm255, %v329
        %338 = vst.msk [vmem:[%s236 + $0x8] sm:$0xff] %vm255, %v334
        %s339 = sand.u32 %s121, 1
        %s340 = scalar_lea.sflag [#allocation4], %s339
        %s341 = sand.u32 %s121, 1
        %s342 = smul.addr %s341, 16
        %s343 = scalar_lea.vmem [#allocation7], %s342
        // Predicated region
        $region41: #{tpu_custom_call.1} parent=31 // pred_check
          %p344 = pneg %p131
        $region42: #{tpu_custom_call.1} parent=31 // pred_check_branch
          %346 = sbr.rel (%p344) target = $region44
        $region43: #{tpu_custom_call.1} parent=31 // pred_region
          %s347 = smul.u32 2, %s25
          %s349 = ssub.s32 256, 256
          %350 = vsyncadd %s340, %s349
          %s351 = smul.addr %s26, 2
          %s352 = sadd.s32 %s347, %s351
          %s353 = smul.addr %s352, 128
          %s354 = scalar_lea.hbm %s3, %s353
          %s355 = sshll.u32 %s343, 4
          %s356 = int_to_ptr.vmem [resolvable:$true] %s355
          %361 = dma.vmem_to_hbm [thread:$0]  %s356, 256, %s354, %s340, 128, 128, 8
        $region44: #{tpu_custom_call.1} parent=31 // pred_fallthru
          _
      $region32: #{tpu_custom_call.1} parent=5 // pred_fallthru
        _
      %p362 = scmp.le.s32.totalorder 2, %s16
      // Predicated region
      $region45: #{tpu_custom_call.1} parent=5 // pred_check
        %p363 = pneg %p362
      $region46: #{tpu_custom_call.1} parent=5 // pred_check_branch
        %365 = sbr.rel (%p363) target = $region48
      $region47: #{tpu_custom_call.1} parent=5 // pred_region
        %s366 = ssub.s32 %s16, 2
        // Predicated region
        $region49: #{tpu_custom_call.1} parent=47 // pred_check
          %p367 = pneg %p137
        $region50: #{tpu_custom_call.1} parent=47 // pred_check_branch
          %369 = sbr.rel (%p367) target = $region52
        $region51: #{tpu_custom_call.1} parent=47 // pred_region
          %s370 = sand.u32 %s122, 1
          %s371 = scalar_lea.sflag [#allocation4], %s370
          %s372 = sand.u32 %s122, 1
          %s373 = smul.addr %s372, 16
          %s374 = scalar_lea.vmem [#allocation7], %s373
          %375 = dma.done %s371, 256
        $region52: #{tpu_custom_call.1} parent=47 // pred_fallthru
          _
      $region48: #{tpu_custom_call.1} parent=5 // pred_fallthru
        _
    $region6: #{tpu_custom_call.1} parent=1 // loop_footer
      %s20 = sadd.s32 1, %s16
    $region7: #{tpu_custom_call.1} parent=1 // loop_footer_branch
      %15 = sbr.rel target = $region3
    $region8: #{tpu_custom_call.1} parent=1 // loop_exit
      _
    %376 = vsyncpa [#allocation3], 1
    %s377 = scalar_lea.sflag [#allocation3], 1
    %378 = vsyncpa %s377, 1
    %379 = vsyncpa [#allocation6], 1
    %s380 = scalar_lea.sflag [#allocation6], 1
    %381 = vsyncpa %s380, 1
    %382 = vsyncpa [#allocation4], 1
    %s383 = scalar_lea.sflag [#allocation4], 1
    %384 = vsyncpa %s383, 1

</llo_original>
